<compile_context>
chip_gen: v6e
topology: v6e:2x2x1
jax: 0.10.0
libtpu: 0.0.40
codegen_flags: <defaults>
</compile_context>

<pallas_src>
import jax
import jax.numpy as jnp
from jax.experimental import pallas as pl
from jax.experimental.pallas import tpu as pltpu


def _patchify_kernel(x_ref, w_ref, b_ref, o_ref):
    """One (batch, patch-block) grid step.

    x_ref: (1, c, TN, p)   f32   native-layout activation tile
    w_ref: (c, p, E_pad)   bf16  resident weight, rows regrouped by channel
    b_ref: (1, E_pad)      f32   resident bias
    o_ref: (1, TN, E_pad)  f32   lane-dense output tile
    """
    c = x_ref.shape[1]
    # out[n, e] = sum_ch sum_pp x[ch, n, pp] * W[pp*c + ch, e]
    acc = jnp.dot(x_ref[0, 0].astype(jnp.bfloat16), w_ref[0],
                  preferred_element_type=jnp.float32)
    for ch in range(1, c):  # c is small (in_channels); statically unrolled
        acc = acc + jnp.dot(x_ref[0, ch].astype(jnp.bfloat16), w_ref[ch],
                            preferred_element_type=jnp.float32)
    o_ref[0] = (acc + b_ref[...]).astype(o_ref.dtype)


def patchify1d_forward(x, weight, bias, patch_size):
    """Pallas TPU forward of Patchify1D.

    x:      (b, c, length) f32
    weight: (p*c, E) f32   (transpose of the PyTorch (E, p*c) Linear weight)
    bias:   (E,) f32
    returns (b, length // p, E) f32
    """
    b, c, length = x.shape
    p = patch_size
    assert length % p == 0, "signal length must be a multiple of patch_size"
    n = length // p
    k, e = weight.shape
    assert k == p * c

    # ---- one-time parameter prep (tiny arrays) -----------------------------
    e_pad = ((e + 127) // 128) * 128                       # lane-dense output
    # PyTorch feature index f = pp*c + ch  ->  view (p, c, E), regroup by channel
    w3 = weight.reshape(p, c, e).transpose(1, 0, 2)        # (c, p, E)
    if e_pad != e:
        w3 = jnp.pad(w3, ((0, 0), (0, 0), (0, e_pad - e)))
        bias_p = jnp.pad(bias, (0, e_pad - e))
    else:
        bias_p = bias
    w3 = w3.astype(jnp.bfloat16)                           # MXU-native dtype
    bias2d = bias_p.reshape(1, e_pad).astype(jnp.float32)

    # ---- activation: contiguous view only (no HBM transpose) ---------------
    x4 = x.reshape(b, c, n, p)                             # free reshape

    # ---- pick the patch-tile size against VMEM -----------------------------
    # x tile is lane-padded to 128 lanes when p < 128; keep double-buffered
    # x+out tiles under ~8 MiB so v5e(16 MiB)/v7x(32 MiB) scoped defaults fit.
    lane_p = max(p, 128)
    per_row = 4 * (c * lane_p + e_pad)                     # f32 bytes / patch row
    tn = (8 * 1024 * 1024) // (2 * per_row)
    tn = min(1024, max(8, (tn // 8) * 8))                  # f32 sublane multiple
    if n <= tn:
        tn = n                                             # full-dim block: always legal
        n_pad = n
    else:
        n_pad = ((n + tn - 1) // tn) * tn                  # handle remainder by padding
        if n_pad != n:
            x4 = jnp.pad(x4, ((0, 0), (0, 0), (0, n_pad - n), (0, 0)))

    grid = (b, n_pad // tn)

    cost = pl.CostEstimate(
        flops=2 * b * n_pad * p * c * e_pad,
        transcendentals=0,
        bytes_accessed=4 * b * n_pad * (p * c + e_pad) + 2 * c * p * e_pad,
    )

    out = pl.pallas_call(
        _patchify_kernel,
        out_shape=jax.ShapeDtypeStruct((b, n_pad, e_pad), jnp.float32),
        grid_spec=pltpu.PrefetchScalarGridSpec(
            num_scalar_prefetch=0,
            grid=grid,
            in_specs=[
                # x tile: pipelined per grid step
                pl.BlockSpec((1, c, tn, p), lambda bi, ni: (bi, 0, ni, 0)),
                # weight + bias: constant index_map -> VMEM-resident across the grid
                pl.BlockSpec((c, p, e_pad), lambda bi, ni: (0, 0, 0)),
                pl.BlockSpec((1, e_pad), lambda bi, ni: (0, 0)),
            ],
            out_specs=pl.BlockSpec((1, tn, e_pad), lambda bi, ni: (bi, ni, 0)),
        ),
        compiler_params=pltpu.CompilerParams(
            dimension_semantics=("parallel", "parallel")),
        cost_estimate=cost,
    )(x4, w3, bias2d)

    # Strip patch-axis and lane padding (no-op when nothing was padded).
    return out[:, :n, :e]


if __name__ == "__main__":
    # Small, consistent shapes: batch=2, channels=4, signal_length=64,
    # patch_size=8 -> N=8 patches, K=p*c=32 features, embed_dim=32.
    b, c, length = 2, 4, 64
    patch_size = 8
    embed_dim = 32
    k_in = patch_size * c

    key = jax.random.PRNGKey(0)
    kx, kw, kb = jax.random.split(key, 3)

    x = jax.random.normal(kx, (b, c, length), dtype=jnp.float32)
    # Deterministic parameter init (mimics nn.Linear uniform(-1/sqrt(K), 1/sqrt(K))).
    bound = 1.0 / jnp.sqrt(jnp.float32(k_in))
    # PyTorch weight is (E, K); we store its transpose (K, E) for the kernel.
    weight = jax.random.uniform(kw, (k_in, embed_dim), jnp.float32, -bound, bound)
    bias = jax.random.uniform(kb, (embed_dim,), jnp.float32, -bound, bound)

    out = patchify1d_forward(x, weight, bias, patch_size)
    out = jax.block_until_ready(out)

    n = length // patch_size
    # Pure-JAX references (exact PyTorch permute/view semantics).
    patches = (x.reshape(b, c, n, patch_size)
                 .transpose(0, 2, 3, 1)
                 .reshape(b, n, patch_size * c))
    ref_f32 = patches @ weight + bias
    # bf16-quantized reference: kernel feeds the MXU bf16, accumulates in f32.
    ref_bf16 = (patches.astype(jnp.bfloat16).astype(jnp.float32)
                @ weight.astype(jnp.bfloat16).astype(jnp.float32) + bias)

    assert out.shape == (b, n, embed_dim)
    assert jnp.allclose(out, ref_bf16, atol=1e-4, rtol=1e-4)   # tight vs bf16-exact math
    assert jnp.allclose(out, ref_f32, atol=5e-2, rtol=5e-2)    # loose vs full-f32 math

    print("KERNEL_OK")
</pallas_src>

<mosaic_0001>
module attributes {stable_mosaic.version = 11 : i64} {
  func.func @_patchify_kernel(%arg0: i32, %arg1: i32, %arg2: memref<1x4x8x8xf32, #tpu.memory_space<vmem>>, %arg3: memref<4x8x128xbf16, #tpu.memory_space<vmem>>, %arg4: memref<1x128xf32, #tpu.memory_space<vmem>>, %arg5: memref<1x8x128xf32, #tpu.memory_space<vmem>>) attributes {dimension_semantics = [#tpu.dimension_semantics<parallel>, #tpu.dimension_semantics<parallel>], iteration_bounds = array<i64: 2, 1>, scalar_prefetch = 0 : i64, scratch_operands = 0 : i64, tpu.core_type = #tpu.core_type<tc>, window_params = [{transform_indices = @transform_0, window_bounds = array<i64: 1, 4, 8, 8>}, {pipeline_mode = #tpu.pipeline_mode<synchronous>, transform_indices = @transform_1, window_bounds = array<i64: 4, 8, 128>}, {pipeline_mode = #tpu.pipeline_mode<synchronous>, transform_indices = @transform_2, window_bounds = array<i64: 1, 128>}, {transform_indices = @transform_3, window_bounds = array<i64: 1, 8, 128>}]} {
    %c0 = arith.constant 0 : index
    %c0_0 = arith.constant 0 : index
    %c0_1 = arith.constant 0 : index
    %c0_2 = arith.constant 0 : index
    %0 = vector.load %arg2[%c0, %c0_0, %c0_1, %c0_2] : memref<1x4x8x8xf32, #tpu.memory_space<vmem>>, vector<1x1x8x8xf32>
    %1 = vector.shape_cast %0 : vector<1x1x8x8xf32> to vector<8x8xf32>
    %2 = arith.truncf %1 : vector<8x8xf32> to vector<8x8xbf16>
    %c0_3 = arith.constant 0 : index
    %c0_4 = arith.constant 0 : index
    %c0_5 = arith.constant 0 : index
    %3 = vector.load %arg3[%c0_3, %c0_4, %c0_5] : memref<4x8x128xbf16, #tpu.memory_space<vmem>>, vector<1x8x128xbf16>
    %4 = vector.shape_cast %3 : vector<1x8x128xbf16> to vector<8x128xbf16>
    %cst = arith.constant dense<0.000000e+00> : vector<8x128xf32>
    %5 = tpu.matmul %2, %4, %cst {dimension_numbers = #tpu.dot_dimension_numbers<[1], [0], [0], [1], [0, 0, 1, 1], [], []>} : vector<8x8xbf16>, vector<8x128xbf16>, vector<8x128xf32> -> vector<8x128xf32>
    %c0_6 = arith.constant 0 : index
    %c1 = arith.constant 1 : index
    %c0_7 = arith.constant 0 : index
    %c0_8 = arith.constant 0 : index
    %6 = vector.load %arg2[%c0_6, %c1, %c0_7, %c0_8] : memref<1x4x8x8xf32, #tpu.memory_space<vmem>>, vector<1x1x8x8xf32>
    %7 = vector.shape_cast %6 : vector<1x1x8x8xf32> to vector<8x8xf32>
    %8 = arith.truncf %7 : vector<8x8xf32> to vector<8x8xbf16>
    %c1_9 = arith.constant 1 : index
    %c0_10 = arith.constant 0 : index
    %c0_11 = arith.constant 0 : index
    %9 = vector.load %arg3[%c1_9, %c0_10, %c0_11] : memref<4x8x128xbf16, #tpu.memory_space<vmem>>, vector<1x8x128xbf16>
    %10 = vector.shape_cast %9 : vector<1x8x128xbf16> to vector<8x128xbf16>
    %cst_12 = arith.constant dense<0.000000e+00> : vector<8x128xf32>
    %11 = tpu.matmul %8, %10, %cst_12 {dimension_numbers = #tpu.dot_dimension_numbers<[1], [0], [0], [1], [0, 0, 1, 1], [], []>} : vector<8x8xbf16>, vector<8x128xbf16>, vector<8x128xf32> -> vector<8x128xf32>
    %12 = arith.addf %5, %11 : vector<8x128xf32>
    %c0_13 = arith.constant 0 : index
    %c2 = arith.constant 2 : index
    %c0_14 = arith.constant 0 : index
    %c0_15 = arith.constant 0 : index
    %13 = vector.load %arg2[%c0_13, %c2, %c0_14, %c0_15] : memref<1x4x8x8xf32, #tpu.memory_space<vmem>>, vector<1x1x8x8xf32>
    %14 = vector.shape_cast %13 : vector<1x1x8x8xf32> to vector<8x8xf32>
    %15 = arith.truncf %14 : vector<8x8xf32> to vector<8x8xbf16>
    %c2_16 = arith.constant 2 : index
    %c0_17 = arith.constant 0 : index
    %c0_18 = arith.constant 0 : index
    %16 = vector.load %arg3[%c2_16, %c0_17, %c0_18] : memref<4x8x128xbf16, #tpu.memory_space<vmem>>, vector<1x8x128xbf16>
    %17 = vector.shape_cast %16 : vector<1x8x128xbf16> to vector<8x128xbf16>
    %cst_19 = arith.constant dense<0.000000e+00> : vector<8x128xf32>
    %18 = tpu.matmul %15, %17, %cst_19 {dimension_numbers = #tpu.dot_dimension_numbers<[1], [0], [0], [1], [0, 0, 1, 1], [], []>} : vector<8x8xbf16>, vector<8x128xbf16>, vector<8x128xf32> -> vector<8x128xf32>
    %19 = arith.addf %12, %18 : vector<8x128xf32>
    %c0_20 = arith.constant 0 : index
    %c3 = arith.constant 3 : index
    %c0_21 = arith.constant 0 : index
    %c0_22 = arith.constant 0 : index
    %20 = vector.load %arg2[%c0_20, %c3, %c0_21, %c0_22] : memref<1x4x8x8xf32, #tpu.memory_space<vmem>>, vector<1x1x8x8xf32>
    %21 = vector.shape_cast %20 : vector<1x1x8x8xf32> to vector<8x8xf32>
    %22 = arith.truncf %21 : vector<8x8xf32> to vector<8x8xbf16>
    %c3_23 = arith.constant 3 : index
    %c0_24 = arith.constant 0 : index
    %c0_25 = arith.constant 0 : index
    %23 = vector.load %arg3[%c3_23, %c0_24, %c0_25] : memref<4x8x128xbf16, #tpu.memory_space<vmem>>, vector<1x8x128xbf16>
    %24 = vector.shape_cast %23 : vector<1x8x128xbf16> to vector<8x128xbf16>
    %cst_26 = arith.constant dense<0.000000e+00> : vector<8x128xf32>
    %25 = tpu.matmul %22, %24, %cst_26 {dimension_numbers = #tpu.dot_dimension_numbers<[1], [0], [0], [1], [0, 0, 1, 1], [], []>} : vector<8x8xbf16>, vector<8x128xbf16>, vector<8x128xf32> -> vector<8x128xf32>
    %26 = arith.addf %19, %25 : vector<8x128xf32>
    %c0_27 = arith.constant 0 : index
    %c0_28 = arith.constant 0 : index
    %27 = vector.load %arg4[%c0_27, %c0_28] : memref<1x128xf32, #tpu.memory_space<vmem>>, vector<1x128xf32>
    %28 = vector.broadcast %27 : vector<1x128xf32> to vector<8x128xf32>
    %29 = arith.addf %26, %28 : vector<8x128xf32>
    %c0_29 = arith.constant 0 : index
    %c0_30 = arith.constant 0 : index
    %c0_31 = arith.constant 0 : index
    %30 = vector.load %arg5[%c0_29, %c0_30, %c0_31] : memref<1x8x128xf32, #tpu.memory_space<vmem>>, vector<1x8x128xf32>
    %31 = vector.shape_cast %30 : vector<1x8x128xf32> to vector<8x128xf32>
    %32 = vector.shape_cast %29 : vector<8x128xf32> to vector<1x8x128xf32>
    tpu.vector_store %arg5[%c0_29, %c0_30, %c0_31], %32 {strides = array<i32>} : memref<1x8x128xf32, #tpu.memory_space<vmem>>, vector<1x8x128xf32>,
    return
  }
  func.func @transform_0(%arg0: i32, %arg1: i32) -> (i32, i32, i32, i32) {
    %c0_i32 = arith.constant 0 : i32
    %c0_i32_0 = arith.constant 0 : i32
    %c0_i32_1 = arith.constant 0 : i32
    return %arg0, %c0_i32, %arg1, %c0_i32_0 : i32, i32, i32, i32
  }
  func.func @transform_1(%arg0: i32, %arg1: i32) -> (i32, i32, i32) {
    %c0_i32 = arith.constant 0 : i32
    %c0_i32_0 = arith.constant 0 : i32
    %c0_i32_1 = arith.constant 0 : i32
    %c0_i32_2 = arith.constant 0 : i32
    return %c0_i32, %c0_i32_0, %c0_i32_1 : i32, i32, i32
  }
  func.func @transform_2(%arg0: i32, %arg1: i32) -> (i32, i32) {
    %c0_i32 = arith.constant 0 : i32
    %c0_i32_0 = arith.constant 0 : i32
    %c0_i32_1 = arith.constant 0 : i32
    return %c0_i32, %c0_i32_0 : i32, i32
  }
  func.func @transform_3(%arg0: i32, %arg1: i32) -> (i32, i32, i32) {
    %c0_i32 = arith.constant 0 : i32
    %c0_i32_0 = arith.constant 0 : i32
    return %arg0, %arg1, %c0_i32 : i32, i32, i32
  }
}

</mosaic_0001>

<llo_original>
// kernel: tpu_custom_call.1
$region0: #{tpu_custom_call.1}
  #allocation0 [shape = 'u32[]', space=smem, size = 0x4, offset = 0x4, fixed_abs, tag = 'smem constant byte address 0x4 - core index']
  #allocation1 [shape = 'u32[144,128]{1,0:T(1,128)}', space=vmem, size = 0x12000, scoped, tag = 'internal scratch']
  %s0 = inlined_call_operand.hbm [shape: f32[2,4,8,8], index: 0, kind: input, shape index: {}]
  %s1 = inlined_call_operand.hbm [shape: bf16[4,8,128], index: 1, kind: input, shape index: {}]
  %s2 = inlined_call_operand.vmem [shape: f32[1,128], index: 2, kind: input, shape index: {}]
  %s3 = inlined_call_operand.hbm [shape: f32[2,8,128], index: 3, kind: output, shape index: {}]
  %s4 = sld [smem:[#allocation0]]
  $region53: #{tpu_custom_call.1} parent=0
    _
  %s6 = ssub.s32 1, %s4
  %s7 = scalar_select 0, %s6, %s4
  $region1: #{tpu_custom_call.1} parent=0
    #allocation2 [shape = 'u8[32768]{0}', space=vmem, size = 0x8000, scoped, tag = 'input window, operand 0']
    #allocation3 [shape = 's32[2]{0}', space=sflag, size = 0x8, scoped, tag = 'scoped memory for tpu_custom_call.1']
    #allocation4 [shape = 's32[2]{0}', space=sflag, size = 0x8, scoped, tag = 'scoped memory for tpu_custom_call.1']
    #allocation5 [shape = 'u8[8192]{0}', space=vmem, size = 0x2000, scoped, tag = 'input window, operand 1, single buffered']
    #allocation6 [shape = 's32[1]{0}', space=sflag, size = 0x4, scoped, tag = 'scoped memory for tpu_custom_call.1']
    #allocation7 [shape = 'u8[8192]{0}', space=vmem, size = 0x2000, scoped, tag = 'output window, operand 0']
    %8 = vsyncpa [#allocation3], 0
    %s9 = scalar_lea.sflag [#allocation3], 1
    %10 = vsyncpa %s9, 0
    %11 = vsyncpa [#allocation6], 0
    %12 = vsyncpa [#allocation4], 0
    %s13 = scalar_lea.sflag [#allocation4], 1
    %14 = vsyncpa %s13, 0
    loop: start=0, step=1, limit=4
    $region2: #{tpu_custom_call.1} parent=1 // loop_pre_header
      _
    $region3: #{tpu_custom_call.1} parent=1 // loop_header
      %s16 = sphi 0, %s20
      %p17 = scmp.ge.s32.totalorder %s16, 4
      %s23 = sphi 0, %s35
      %s24 = sphi 0, %s31
      %s25 = sphi 0, %s23
      %s26 = sphi 0, %s24
      %s27 = sphi 0, %s25
      %s28 = sphi 0, %s26
      %s40 = sphi 0, %s42
      %s43 = sphi 0, %s40
      %s44 = sphi 0, %s43
      %s60 = sphi 0, %s44
      %s64 = sphi 0, %s64
      %s66 = sphi 0, %s64
      %s67 = sphi 0, %s66
      %s81 = sphi 0, %s67
      %s85 = sphi 0, %s85
      %s87 = sphi 0, %s85
      %s88 = sphi 0, %s87
      %s102 = sphi 0, %s88
      %s110 = sphi 0, %s112
      %s113 = sphi 0, %s110
      %s114 = sphi 0, %s113
      %s130 = sphi 0, %s114
    $region4: #{tpu_custom_call.1} parent=1 // loop_header_branch
      %19 = sbr.rel (%p17) target = $region8
    $region5: #{tpu_custom_call.1} parent=1 // loop_body
      %s21 = ssub.s32 %s16, 1
      %s22 = ssub.s32 %s16, 2
      %s29 = sadd.s32 1, %s24
      %p30 = scmp.ge.s32.totalorder %s29, 1
      %s31 = scalar_select %p30, 0, %s29
      %s32 = sadd.s32 1, %s23
      %s33 = scalar_select %p30, %s32, %s23
      %p34 = scmp.ge.s32.totalorder %s33, 2
      %s35 = scalar_select %p34, 0, %s33
      %s36 = ssub.s32 %s23, %s35
      %s37 = ssub.s32 %s24, %s31
      %s38 = sor.u32 %s36, %s37
      %p39 = scmp.eq.s32.totalorder %s38, 0
      %s41 = sadd.s32 %s40, 1
      %s42 = scalar_select %p39, %s40, %s41
      %p45 = pneg %p39
      %p46 = scmp.eq.s32.totalorder %s16, 1
      %p47 = por %p45, %p46
      %p48 = scmp.ne.s32.totalorder %s40, %s43
      %p49 = scmp.eq.s32.totalorder %s16, 0
      %p50 = por %p48, %p49
      %p51 = scmp.ne.s32.totalorder %s40, %s43
      %p52 = scmp.eq.s32.totalorder %s21, 1
      %p53 = por %p51, %p52
      %p54 = scmp.ne.s32.totalorder %s43, %s44
      %p55 = scmp.eq.s32.totalorder %s21, 0
      %p56 = por %p54, %p55
      %p57 = scmp.ne.s32.totalorder %s43, %s44
      %p58 = scmp.eq.s32.totalorder %s22, 1
      %p59 = por %p57, %p58
      %p61 = scmp.ne.s32.totalorder %s44, %s60
      %p62 = scmp.eq.s32.totalorder %s22, 0
      %p63 = por %p61, %p62
      %s65 = sadd.s32 %s64, 1
      %p68 = scmp.eq.s32.totalorder %s16, 1
      %p69 = scmp.ne.s32.totalorder %s64, %s66
      %p70 = scmp.eq.s32.totalorder %s16, 0
      %p71 = por %p69, %p70
      %p72 = scmp.ne.s32.totalorder %s64, %s66
      %p73 = scmp.eq.s32.totalorder %s21, 1
      %p74 = por %p72, %p73
      %p75 = scmp.ne.s32.totalorder %s66, %s67
      %p76 = scmp.eq.s32.totalorder %s21, 0
      %p77 = por %p75, %p76
      %p78 = scmp.ne.s32.totalorder %s66, %s67
      %p79 = scmp.eq.s32.totalorder %s22, 1
      %p80 = por %p78, %p79
      %p82 = scmp.ne.s32.totalorder %s67, %s81
      %p83 = scmp.eq.s32.totalorder %s22, 0
      %p84 = por %p82, %p83
      %s86 = sadd.s32 %s85, 1
      %p89 = scmp.eq.s32.totalorder %s16, 1
      %p90 = scmp.ne.s32.totalorder %s85, %s87
      %p91 = scmp.eq.s32.totalorder %s16, 0
      %p92 = por %p90, %p91
      %p93 = scmp.ne.s32.totalorder %s85, %s87
      %p94 = scmp.eq.s32.totalorder %s21, 1
      %p95 = por %p93, %p94
      %p96 = scmp.ne.s32.totalorder %s87, %s88
      %p97 = scmp.eq.s32.totalorder %s21, 0
      %p98 = por %p96, %p97
      %p99 = scmp.ne.s32.totalorder %s87, %s88
      %p100 = scmp.eq.s32.totalorder %s22, 1
      %p101 = por %p99, %p100
      %p103 = scmp.ne.s32.totalorder %s88, %s102
      %p104 = scmp.eq.s32.totalorder %s22, 0
      %p105 = por %p103, %p104
      %s106 = ssub.s32 %s23, %s35
      %s107 = ssub.s32 %s24, %s31
      %s108 = sor.u32 %s106, %s107
      %p109 = scmp.eq.s32.totalorder %s108, 0
      %s111 = sadd.s32 %s110, 1
      %s112 = scalar_select %p109, %s110, %s111
      %p115 = pneg %p109
      %p116 = scmp.eq.s32.totalorder %s16, 1
      %p117 = por %p115, %p116
      %p118 = scmp.ne.s32.totalorder %s110, %s113
      %p119 = scmp.eq.s32.totalorder %s16, 0
      %p120 = por %p118, %p119
      %p121 = scmp.ne.s32.totalorder %s110, %s113
      %p122 = scmp.eq.s32.totalorder %s21, 1
      %p123 = por %p121, %p122
      %p124 = scmp.ne.s32.totalorder %s113, %s114
      %p125 = scmp.eq.s32.totalorder %s21, 0
      %p126 = por %p124, %p125
      %p127 = scmp.ne.s32.totalorder %s113, %s114
      %p128 = scmp.eq.s32.totalorder %s22, 1
      %p129 = por %p127, %p128
      %p131 = scmp.ne.s32.totalorder %s114, %s130
      %p132 = scmp.eq.s32.totalorder %s22, 0
      %p133 = por %p131, %p132
      %p134 = scmp.le.s32.totalorder 1, %s16
      %p135 = scmp.lt.s32.totalorder %s16, 3
      %p136 = pnand %p134, %p135
      %p137 = pneg %p136
      // Predicated region
      $region9: #{tpu_custom_call.1} parent=5 // pred_check
        _
      $region10: #{tpu_custom_call.1} parent=5 // pred_check_branch
        %139 = sbr.rel (%p136) target = $region12
      $region11: #{tpu_custom_call.1} parent=5 // pred_region
        %s140 = ssub.s32 %s16, 1
        // Predicated region
        $region13: #{tpu_custom_call.1} parent=11 // pred_check
          %p141 = pneg %p77
        $region14: #{tpu_custom_call.1} parent=11 // pred_check_branch
          %143 = sbr.rel (%p141) target = $region16
        $region15: #{tpu_custom_call.1} parent=11 // pred_region
          %s145 = ssub.s32 256, 256
          %146 = vsyncadd [#allocation6], %s145
          %s147 = sshll.u32 [#allocation5], 4
          %s148 = int_to_ptr.vmem [resolvable:$true] %s147
          %153 = dma.hbm_to_vmem [thread:$0]  %s1, 256, %s148, [#allocation6], 64, 64, 4
        $region16: #{tpu_custom_call.1} parent=11 // pred_fallthru
          _
        // Predicated region
        $region17: #{tpu_custom_call.1} parent=11 // pred_check
          %p154 = pneg %p98
        $region18: #{tpu_custom_call.1} parent=11 // pred_check_branch
          %156 = sbr.rel (%p154) target = $region20
        $region19: #{tpu_custom_call.1} parent=11 // pred_region
          _
        $region20: #{tpu_custom_call.1} parent=11 // pred_fallthru
          _
      $region12: #{tpu_custom_call.1} parent=5 // pred_fallthru
        _
      %p157 = scmp.lt.s32.totalorder %s16, 2
      // Predicated region
      $region21: #{tpu_custom_call.1} parent=5 // pred_check
        %p158 = pneg %p157
      $region22: #{tpu_custom_call.1} parent=5 // pred_check_branch
        %160 = sbr.rel (%p158) target = $region24
      $region23: #{tpu_custom_call.1} parent=5 // pred_region
        // Predicated region
        $region25: #{tpu_custom_call.1} parent=23 // pred_check
          %p161 = pneg %p50
        $region26: #{tpu_custom_call.1} parent=23 // pred_check_branch
          %163 = sbr.rel (%p161) target = $region28
        $region27: #{tpu_custom_call.1} parent=23 // pred_region
          %s164 = sand.u32 %s40, 1
          %s165 = scalar_lea.sflag [#allocation3], %s164
          %s166 = sand.u32 %s40, 1
          %s167 = smul.addr %s166, 32
          %s168 = scalar_lea.vmem [#allocation2], %s167
          %s170 = ssub.s32 512, 512
          %171 = vsyncadd %s165, %s170
          %s172 = smul.addr %s23, 4
          %s173 = sadd.s32 %s24, %s172
          %s174 = smul.addr %s173, 128
          %s175 = scalar_lea.hbm %s0, %s174
          %s176 = sshll.u32 %s168, 4
          %s177 = int_to_ptr.vmem [resolvable:$true] %s176
          %182 = dma.hbm_to_vmem [thread:$0]  %s175, 512, %s177, %s165, 128, 128, 8
        $region28: #{tpu_custom_call.1} parent=23 // pred_fallthru
          _
      $region24: #{tpu_custom_call.1} parent=5 // pred_fallthru
        _
      %p183 = scmp.le.s32.totalorder 1, %s16
      %p184 = scmp.lt.s32.totalorder %s16, 3
      %p185 = pnand %p183, %p184
      %p186 = pneg %p185
      // Predicated region
      $region29: #{tpu_custom_call.1} parent=5 // pred_check
        _
      $region30: #{tpu_custom_call.1} parent=5 // pred_check_branch
        %188 = sbr.rel (%p185) target = $region32
      $region31: #{tpu_custom_call.1} parent=5 // pred_region
        %s189 = ssub.s32 %s16, 1
        %s190 = sand.u32 %s43, 1
        %s191 = scalar_lea.sflag [#allocation3], %s190
        %s192 = sand.u32 %s43, 1
        %s193 = smul.addr %s192, 32
        %s194 = scalar_lea.vmem [#allocation2], %s193
        // Predicated region
        $region33: #{tpu_custom_call.1} parent=31 // pred_check
          %p195 = pneg %p56
        $region34: #{tpu_custom_call.1} parent=31 // pred_check_branch
          %197 = sbr.rel (%p195) target = $region36
        $region35: #{tpu_custom_call.1} parent=31 // pred_region
          %198 = dma.done %s191, 512
        $region36: #{tpu_custom_call.1} parent=31 // pred_fallthru
          _
        // Predicated region
        $region37: #{tpu_custom_call.1} parent=31 // pred_check
          %p199 = pneg %p77
        $region38: #{tpu_custom_call.1} parent=31 // pred_check_branch
          %201 = sbr.rel (%p199) target = $region40
        $region39: #{tpu_custom_call.1} parent=31 // pred_region
          %202 = dma.done [#allocation6], 256
        $region40: #{tpu_custom_call.1} parent=31 // pred_fallthru
          _
        %s203 = sand.u32 %s43, 1
        %s204 = scalar_lea.sflag [#allocation3], %s203
        %s205 = sand.u32 %s43, 1
        %s206 = smul.addr %s205, 32
        %s207 = scalar_lea.vmem [#allocation2], %s206
        %p208 = pneg %p56
        %p209 = pneg %p53
        %p210 = pneg %p77
        %p211 = pneg %p74
        %p212 = pneg %p98
        %p213 = pneg %p95
        %p214 = pneg %p126
        %p215 = pneg %p123
        %s216 = sand.u32 %s113, 1
        %s217 = scalar_lea.sflag [#allocation4], %s216
        %s218 = sand.u32 %s113, 1
        %s219 = smul.addr %s218, 8
        %s220 = scalar_lea.vmem [#allocation7], %s219
        %v222 = vld [vmem:[%s194] sm:$0xff]
        %v223 = vpack.c.bf16 %v222, %v222
        %v224 = vld [vmem:[#allocation5] sm:$0xf]
        %s225 = scalar_lea.vmem %s194, 8 [#allocation2]
        %v226 = vld [vmem:[%s225] sm:$0xff]
        %v227 = vpack.c.bf16 %v226, %v226
        %s228 = scalar_lea.vmem [#allocation5], 4
        %v229 = vld [vmem:[%s228] sm:$0xf]
        %vm230 = vcmask 64512
        %v232 = vsel %vm230, %v227, 0
        %vm234 = vcmask 1043456
        %v236 = vsel %vm234, %v229, 0
        %238 = vmatprep.subr.bf16.mxu0 0
        %239 = vmatpush1.bf16.msra.mxu0 0
        %240 = vmatprep.subr.bf16.mxu0 0
        %241 = vmatpush1.bf16.msra.mxu0 0
        %242 = vmatprep.subr.bf16.mxu0 0
        %243 = vmatpush1.bf16.msra.mxu0 0
        %244 = vmatprep.subr.bf16.mxu0 0
        %245 = vmatpush1.bf16.msra.mxu0 0
        %246 = vmatprep.subr.bf16.mxu0 0
        %247 = vmatpush1.bf16.msra.mxu0 0
        %248 = vmatprep.subr.bf16.mxu0 0
        %249 = vmatpush1.bf16.msra.mxu0 0
        %250 = vmatprep.subr.bf16.mxu0 0
        %251 = vmatpush1.bf16.msra.mxu0 0
        %252 = vmatprep.subr.bf16.mxu0 0
        %253 = vmatpush1.bf16.msra.mxu0 %v236
        %254 = vmatprep.subr.bf16.mxu0 0
        %255 = vmatpush2.bf16.msra.mxu0 0
        %256 = vmatprep.subr.bf16.mxu0 0
        %257 = vmatpush2.bf16.msra.mxu0 0
        %258 = vmatprep.subr.bf16.mxu0 0
        %259 = vmatpush2.bf16.msra.mxu0 0
        %260 = vmatprep.subr.bf16.mxu0 0
        %261 = vmatpush2.bf16.msra.mxu0 0
        %262 = vmatprep.subr.bf16.mxu0 0
        %263 = vmatpush2.bf16.msra.mxu0 0
        %264 = vmatprep.subr.bf16.mxu0 0
        %265 = vmatpush2.bf16.msra.mxu0 0
        %266 = vmatprep.subr.bf16.mxu0 0
        %267 = vmatpush2.bf16.msra.mxu0 0
        %268 = vmatprep.subr.bf16.mxu0 0
        %269 = vmatpush2.bf16.msra.mxu0 0
        %270 = vmatprep.mubr.bf16.mxu0 0
        %271 = vmatmul.mubr.bf16.gmra.mxu0 %v232
        %v272 = vpop.f32.mrf.mxu0
        %v273 = vadd.f32 0.0, %v272
        %v274 = vpop.f32.mrf.mxu0
        %v275 = vpop.f32.mrf.mxu0
        %v276 = vpop.f32.mrf.mxu0
        %277 = vdwg.mxu0
        %v279 = vsel %vm230, %v223, 0
        %v282 = vsel %vm234, %v224, 0
        %284 = vmatprep.subr.bf16.mxu0 0
        %285 = vmatpush1.bf16.msra.mxu0 0
        %286 = vmatprep.subr.bf16.mxu0 0
        %287 = vmatpush1.bf16.msra.mxu0 0
        %288 = vmatprep.subr.bf16.mxu0 0
        %289 = vmatpush1.bf16.msra.mxu0 0
        %290 = vmatprep.subr.bf16.mxu0 0
        %291 = vmatpush1.bf16.msra.mxu0 0
        %292 = vmatprep.subr.bf16.mxu0 0
        %293 = vmatpush1.bf16.msra.mxu0 0
        %294 = vmatprep.subr.bf16.mxu0 0
        %295 = vmatpush1.bf16.msra.mxu0 0
        %296 = vmatprep.subr.bf16.mxu0 0
        %297 = vmatpush1.bf16.msra.mxu0 0
        %298 = vmatprep.subr.bf16.mxu0 0
        %299 = vmatpush1.bf16.msra.mxu0 %v282
        %300 = vmatprep.subr.bf16.mxu0 0
        %301 = vmatpush2.bf16.msra.mxu0 0
        %302 = vmatprep.subr.bf16.mxu0 0
        %303 = vmatpush2.bf16.msra.mxu0 0
        %304 = vmatprep.subr.bf16.mxu0 0
        %305 = vmatpush2.bf16.msra.mxu0 0
        %306 = vmatprep.subr.bf16.mxu0 0
        %307 = vmatpush2.bf16.msra.mxu0 0
        %308 = vmatprep.subr.bf16.mxu0 0
        %309 = vmatpush2.bf16.msra.mxu0 0
        %310 = vmatprep.subr.bf16.mxu0 0
        %311 = vmatpush2.bf16.msra.mxu0 0
        %312 = vmatprep.subr.bf16.mxu0 0
        %313 = vmatpush2.bf16.msra.mxu0 0
        %314 = vmatprep.subr.bf16.mxu0 0
        %315 = vmatpush2.bf16.msra.mxu0 0
        %316 = vmatprep.mubr.bf16.mxu0 0
        %317 = vmatmul.mubr.bf16.gmra.mxu0 %v279
        %v318 = vpop.f32.mrf.mxu0
        %v319 = vadd.f32 %v273, %v318
        %v320 = vpop.f32.mrf.mxu0
        %v321 = vpop.f32.mrf.mxu0
        %v322 = vpop.f32.mrf.mxu0
        %323 = vdwg.mxu0
        %s324 = scalar_lea.vmem %s194, 16 [#allocation2]
        %v325 = vld [vmem:[%s324] sm:$0xff]
        %v326 = vpack.c.bf16 %v325, %v325
        %s327 = scalar_lea.vmem [#allocation5], 8
        %v328 = vld [vmem:[%s327] sm:$0xf]
        %v330 = vsel %vm230, %v326, 0
        %v333 = vsel %vm234, %v328, 0
        %335 = vmatprep.subr.bf16.mxu0 0
        %336 = vmatpush1.bf16.msra.mxu0 0
        %337 = vmatprep.subr.bf16.mxu0 0
        %338 = vmatpush1.bf16.msra.mxu0 0
        %339 = vmatprep.subr.bf16.mxu0 0
        %340 = vmatpush1.bf16.msra.mxu0 0
        %341 = vmatprep.subr.bf16.mxu0 0
        %342 = vmatpush1.bf16.msra.mxu0 0
        %343 = vmatprep.subr.bf16.mxu0 0
        %344 = vmatpush1.bf16.msra.mxu0 0
        %345 = vmatprep.subr.bf16.mxu0 0
        %346 = vmatpush1.bf16.msra.mxu0 0
        %347 = vmatprep.subr.bf16.mxu0 0
        %348 = vmatpush1.bf16.msra.mxu0 0
        %349 = vmatprep.subr.bf16.mxu0 0
        %350 = vmatpush1.bf16.msra.mxu0 %v333
        %351 = vmatprep.subr.bf16.mxu0 0
        %352 = vmatpush2.bf16.msra.mxu0 0
        %353 = vmatprep.subr.bf16.mxu0 0
        %354 = vmatpush2.bf16.msra.mxu0 0
        %355 = vmatprep.subr.bf16.mxu0 0
        %356 = vmatpush2.bf16.msra.mxu0 0
        %357 = vmatprep.subr.bf16.mxu0 0
        %358 = vmatpush2.bf16.msra.mxu0 0
        %359 = vmatprep.subr.bf16.mxu0 0
        %360 = vmatpush2.bf16.msra.mxu0 0
        %361 = vmatprep.subr.bf16.mxu0 0
        %362 = vmatpush2.bf16.msra.mxu0 0
        %363 = vmatprep.subr.bf16.mxu0 0
        %364 = vmatpush2.bf16.msra.mxu0 0
        %365 = vmatprep.subr.bf16.mxu0 0
        %366 = vmatpush2.bf16.msra.mxu0 0
        %367 = vmatprep.mubr.bf16.mxu0 0
        %368 = vmatmul.mubr.bf16.gmra.mxu0 %v330
        %v369 = vpop.f32.mrf.mxu0
        %v370 = vadd.f32 0.0, %v369
        %v371 = vpop.f32.mrf.mxu0
        %v372 = vpop.f32.mrf.mxu0
        %v373 = vpop.f32.mrf.mxu0
        %374 = vdwg.mxu0
        %v375 = vadd.f32 %v319, %v370
        %s376 = scalar_lea.vmem %s194, 24 [#allocation2]
        %v377 = vld [vmem:[%s376] sm:$0xff]
        %v378 = vpack.c.bf16 %v377, %v377
        %s379 = scalar_lea.vmem [#allocation5], 12
        %v380 = vld [vmem:[%s379] sm:$0xf]
        %v382 = vsel %vm230, %v378, 0
        %v385 = vsel %vm234, %v380, 0
        %387 = vmatprep.subr.bf16.mxu0 0
        %388 = vmatpush1.bf16.msra.mxu0 0
        %389 = vmatprep.subr.bf16.mxu0 0
        %390 = vmatpush1.bf16.msra.mxu0 0
        %391 = vmatprep.subr.bf16.mxu0 0
        %392 = vmatpush1.bf16.msra.mxu0 0
        %393 = vmatprep.subr.bf16.mxu0 0
        %394 = vmatpush1.bf16.msra.mxu0 0
        %395 = vmatprep.subr.bf16.mxu0 0
        %396 = vmatpush1.bf16.msra.mxu0 0
        %397 = vmatprep.subr.bf16.mxu0 0
        %398 = vmatpush1.bf16.msra.mxu0 0
        %399 = vmatprep.subr.bf16.mxu0 0
        %400 = vmatpush1.bf16.msra.mxu0 0
        %401 = vmatprep.subr.bf16.mxu0 0
        %402 = vmatpush1.bf16.msra.mxu0 %v385
        %403 = vmatprep.subr.bf16.mxu0 0
        %404 = vmatpush2.bf16.msra.mxu0 0
        %405 = vmatprep.subr.bf16.mxu0 0
        %406 = vmatpush2.bf16.msra.mxu0 0
        %407 = vmatprep.subr.bf16.mxu0 0
        %408 = vmatpush2.bf16.msra.mxu0 0
        %409 = vmatprep.subr.bf16.mxu0 0
        %410 = vmatpush2.bf16.msra.mxu0 0
        %411 = vmatprep.subr.bf16.mxu0 0
        %412 = vmatpush2.bf16.msra.mxu0 0
        %413 = vmatprep.subr.bf16.mxu0 0
        %414 = vmatpush2.bf16.msra.mxu0 0
        %415 = vmatprep.subr.bf16.mxu0 0
        %416 = vmatpush2.bf16.msra.mxu0 0
        %417 = vmatprep.subr.bf16.mxu0 0
        %418 = vmatpush2.bf16.msra.mxu0 0
        %419 = vmatprep.mubr.bf16.mxu0 0
        %420 = vmatmul.mubr.bf16.gmra.mxu0 %v382
        %v421 = vpop.f32.mrf.mxu0
        %v422 = vadd.f32 0.0, %v421
        %v423 = vpop.f32.mrf.mxu0
        %v424 = vpop.f32.mrf.mxu0
        %v425 = vpop.f32.mrf.mxu0
        %426 = vdwg.mxu0
        %v427 = vadd.f32 %v375, %v422
        %v428 = vld [vmem:[%s2] sm:$0x1]
        %v430 = vlaneseq
        %v431 = vshrl.u32 %v430, 7
        %v432 = vsub.s32 0, %v431
        %v433 = vrot.slane %v428, %v432
        %v435 = vadd.f32 %v427, %v433
        %436 = vst [vmem:[%s220] sm:$0xff] %v435
        %s437 = sand.u32 %s113, 1
        %s438 = scalar_lea.sflag [#allocation4], %s437
        %s439 = sand.u32 %s113, 1
        %s440 = smul.addr %s439, 8
        %s441 = scalar_lea.vmem [#allocation7], %s440
        // Predicated region
        $region41: #{tpu_custom_call.1} parent=31 // pred_check
          %p442 = pneg %p123
        $region42: #{tpu_custom_call.1} parent=31 // pred_check_branch
          %444 = sbr.rel (%p442) target = $region44
        $region43: #{tpu_custom_call.1} parent=31 // pred_region
          %s446 = ssub.s32 128, 128
          %447 = vsyncadd %s438, %s446
          %s448 = sadd.s32 %s26, %s25
          %s449 = smul.addr %s448, 128
          %s450 = scalar_lea.hbm %s3, %s449
          %s452 = sshll.u32 %s441, 4
          %s453 = int_to_ptr.vmem [resolvable:$true] %s452
          %455 = dma.vmem_to_hbm [thread:$0]  %s453, 128, %s450, %s438
        $region44: #{tpu_custom_call.1} parent=31 // pred_fallthru
          _
      $region32: #{tpu_custom_call.1} parent=5 // pred_fallthru
        _
      %p456 = scmp.le.s32.totalorder 2, %s16
      // Predicated region
      $region45: #{tpu_custom_call.1} parent=5 // pred_check
        %p457 = pneg %p456
      $region46: #{tpu_custom_call.1} parent=5 // pred_check_branch
        %459 = sbr.rel (%p457) target = $region48
      $region47: #{tpu_custom_call.1} parent=5 // pred_region
        %s460 = ssub.s32 %s16, 2
        // Predicated region
        $region49: #{tpu_custom_call.1} parent=47 // pred_check
          %p461 = pneg %p129
        $region50: #{tpu_custom_call.1} parent=47 // pred_check_branch
          %463 = sbr.rel (%p461) target = $region52
        $region51: #{tpu_custom_call.1} parent=47 // pred_region
          %s464 = sand.u32 %s114, 1
          %s465 = scalar_lea.sflag [#allocation4], %s464
          %s466 = sand.u32 %s114, 1
          %s467 = smul.addr %s466, 8
          %s468 = scalar_lea.vmem [#allocation7], %s467
          %469 = dma.done %s465, 128
        $region52: #{tpu_custom_call.1} parent=47 // pred_fallthru
          _
      $region48: #{tpu_custom_call.1} parent=5 // pred_fallthru
        _
    $region6: #{tpu_custom_call.1} parent=1 // loop_footer
      %s20 = sadd.s32 1, %s16
    $region7: #{tpu_custom_call.1} parent=1 // loop_footer_branch
      %15 = sbr.rel target = $region3
    $region8: #{tpu_custom_call.1} parent=1 // loop_exit
      _
    %470 = vsyncpa [#allocation3], 1
    %s471 = scalar_lea.sflag [#allocation3], 1
    %472 = vsyncpa %s471, 1
    %473 = vsyncpa [#allocation6], 1
    %474 = vsyncpa [#allocation4], 1
    %s475 = scalar_lea.sflag [#allocation4], 1
    %476 = vsyncpa %s475, 1

</llo_original>
